<compile_context>
chip_gen: v7x
topology: tpu7x:2x2x1
jax: 0.10.0
libtpu: 0.0.40
codegen_flags: <defaults>
</compile_context>

<pallas_src>
import functools

import jax
import jax.numpy as jnp
from jax.experimental import pallas as pl
from jax.experimental.pallas import tpu as pltpu


def _round_up(n, m):
    return ((n + m - 1) // m) * m


def _tpu_generation():
    """Returns (lane_pad, batch_tile_target, vmem_limit_bytes) for the local TPU."""
    try:
        kind = jax.devices()[0].device_kind.lower()
    except Exception:
        kind = ""
    wide_mxu = any(t in kind for t in ("v6", "v7", "7x"))    # 2x256x256 MXU gens
    is_v7x = ("v7" in kind) or ("7x" in kind)
    lane = 256 if wide_mxu else 128
    bm_target = 256 if wide_mxu else 128
    phys_vmem = (64 if is_v7x else 128) * 1024 * 1024        # v7x: 64 MiB per TC
    vmem_limit = phys_vmem * 3 // 4                          # headroom for Mosaic scratch
    return lane, bm_target, vmem_limit


# ---------------- Fused MLP kernel ---------------------------------------------


def _mlp_kernel(num_layers, exact_softmax, *refs):
    """refs = (x_ref, w0, b0, w1, b1, ..., w_last, b_last, o_ref).

    Weights are bf16 with output dims zero-padded to the lane-pad width;
    biases are f32.  Hidden-layer bias pads are 0 (ReLU keeps pad lanes at 0);
    the final layer's bias pads are -1e30, so softmax drops them with no
    in-kernel masking."""
    x_ref = refs[0]
    o_ref = refs[-1]
    params = refs[1:-1]

    h = x_ref[...]                                  # f32 activations
    for l in range(num_layers - 1):
        w = params[2 * l][...]                      # bf16
        b = params[2 * l + 1][...]                  # f32
        # dropout == identity (eval mode), then ReLU
        h = jnp.dot(h.astype(w.dtype), w, preferred_element_type=jnp.float32) + b
        h = jnp.maximum(h, 0.0)

    # output layer + softmax(dim=1); pad lanes carry -1e30 bias -> exp == 0
    w = params[-2][...]
    b = params[-1][...]
    y = jnp.dot(h.astype(w.dtype), w, preferred_element_type=jnp.float32) + b
    m = jnp.max(y, axis=1, keepdims=True)
    e = jnp.exp(y - m)
    denom = jnp.sum(e, axis=1, keepdims=True)
    if exact_softmax:
        o_ref[...] = e / denom
    else:
        o_ref[...] = e * pl.reciprocal(denom, approx=True)   # EUP slot, VALU-free


# ---------------- Wrapper -------------------------------------------------------


def mlp_forward(padded_params, x, out_size, *, exact_softmax=False):
    """padded_params: [(W[Din_pad, Dout_pad] bf16, b[1, Dout_pad] f32), ...].
    x: [B, Din] f32 (input features are NOT padded; only output dims are, so
    the next layer's padded input dim matches automatically).
    Returns [B, out_size] f32 softmax probabilities.

    Dropout is identity (inference); softmax uses an approximate EUP reciprocal
    unless exact_softmax=True."""
    num_layers = len(padded_params)
    B, Din = x.shape
    Dout_pad = padded_params[-1][0].shape[1]

    _, bm_target, vmem_limit = _tpu_generation()

    # Batch tiling: single tile for small B, MXU-M-width tiles once B grows.
    bm = B if B <= bm_target else bm_target
    assert B % bm == 0, "batch must be a multiple of the batch tile"
    grid = (B // bm,)

    # VMEM residency check, including the x2 double-buffer factor the pipeline
    # applies to pipelined operands (weights included -- see Buffered(1) TODO).
    buf_bytes = 2 * bm * Din * x.dtype.itemsize          # x tile
    buf_bytes += 2 * bm * Dout_pad * 4                   # output tile (f32)
    for w, b in padded_params:
        buf_bytes += 2 * (w.size * w.dtype.itemsize + b.size * b.dtype.itemsize)
    assert buf_bytes <= vmem_limit, (
        "operands no longer fit VMEM: K/N-tile with a VMEM accumulator or "
        "stream weight tiles with pltpu.emit_pipeline")

    in_specs = [pl.BlockSpec((bm, Din), lambda i: (i, 0))]
    flat = []
    for w, b in padded_params:
        din_p, dout_p = w.shape
        in_specs.append(pl.BlockSpec((din_p, dout_p), lambda i: (0, 0)))
        in_specs.append(pl.BlockSpec((1, dout_p), lambda i: (0, 0)))
        flat += [w, b]

    out_padded = pl.pallas_call(
        functools.partial(_mlp_kernel, num_layers, exact_softmax),
        out_shape=jax.ShapeDtypeStruct((B, Dout_pad), jnp.float32),
        grid=grid,
        in_specs=in_specs,
        out_specs=pl.BlockSpec((bm, Dout_pad), lambda i: (i, 0)),
        compiler_params=pltpu.CompilerParams(
            dimension_semantics=("parallel",),
            vmem_limit_bytes=vmem_limit),
    )(x, *flat)

    # slice off the lane padding outside the kernel
    return out_padded[:, :out_size]


# ---------------- Parameter init (deterministic, PyTorch-like uniform) ---------


def init_mlp_params(key, h_sizes, out_size, lane_pad):
    """Returns (real_params, padded_params).

    real_params:   f32 [(W[in,out], b[1,out]), ...]   -- for the JAX reference.
    padded_params: bf16 weights / f32 biases with every output dim zero-padded
                   to a multiple of lane_pad; the LAST layer's bias pad lanes
                   are -1e30 (softmax mask), hidden-layer pads stay 0."""
    dims = list(h_sizes) + [out_size]
    real, padded = [], []
    prev_pad_in = dims[0]  # input features are not padded
    for k in range(len(dims) - 1):
        fan_in, fan_out = dims[k], dims[k + 1]
        is_last = (k == len(dims) - 2)
        key, kw, kb = jax.random.split(key, 3)
        bound = 1.0 / float(fan_in) ** 0.5
        w = jax.random.uniform(kw, (fan_in, fan_out), jnp.float32, -bound, bound)
        b = jax.random.uniform(kb, (1, fan_out), jnp.float32, -bound, bound)
        real.append((w, b))

        dout_pad = _round_up(fan_out, lane_pad)
        w_pad = jnp.zeros((prev_pad_in, dout_pad), jnp.float32)
        w_pad = w_pad.at[:fan_in, :fan_out].set(w).astype(jnp.bfloat16)
        pad_fill = -1e30 if is_last else 0.0
        b_pad = jnp.full((1, dout_pad), pad_fill, jnp.float32)
        b_pad = b_pad.at[:, :fan_out].set(b)
        padded.append((w_pad, b_pad))
        prev_pad_in = dout_pad
    return real, padded


# ---------------- Pure-JAX reference --------------------------------------------


def mlp_reference(real_params, x):
    h = x
    for w, b in real_params[:-1]:
        h = jnp.maximum(h @ w + b, 0.0)
    w, b = real_params[-1]
    return jax.nn.softmax(h @ w + b, axis=1)


# ---------------- Main -----------------------------------------------------------

if __name__ == "__main__":
    h_sizes = [32, 64, 48]   # h_sizes[0] is the input feature dim
    out_size = 10
    batch = 8

    lane_pad, _, _ = _tpu_generation()

    key = jax.random.PRNGKey(0)
    key, kx = jax.random.split(key)
    x = jax.random.normal(kx, (batch, h_sizes[0]), jnp.float32)

    real_params, padded_params = init_mlp_params(key, h_sizes, out_size, lane_pad)

    out = mlp_forward(padded_params, x, out_size)
    out = jax.block_until_ready(out)

    assert out.shape == (batch, out_size)
    # sanity: softmax rows sum to ~1 (approx reciprocal on EUP)
    assert jnp.allclose(jnp.sum(out, axis=1), 1.0, atol=1e-2)
    # match the pure-f32 reference within bf16-matmul tolerance
    ref = mlp_reference(real_params, x)
    assert jnp.allclose(out, ref, atol=2e-2, rtol=2e-2)

    print("KERNEL_OK")
</pallas_src>

<mosaic_0001>
module attributes {stable_mosaic.version = 11 : i64} {
  func.func @_mlp_kernel(%arg0: i32, %arg1: memref<8x32xf32, #tpu.memory_space<vmem>>, %arg2: memref<32x128xbf16, #tpu.memory_space<vmem>>, %arg3: memref<1x128xf32, #tpu.memory_space<vmem>>, %arg4: memref<128x128xbf16, #tpu.memory_space<vmem>>, %arg5: memref<1x128xf32, #tpu.memory_space<vmem>>, %arg6: memref<128x128xbf16, #tpu.memory_space<vmem>>, %arg7: memref<1x128xf32, #tpu.memory_space<vmem>>, %arg8: memref<8x128xf32, #tpu.memory_space<vmem>>) attributes {dimension_semantics = [#tpu.dimension_semantics<parallel>], iteration_bounds = array<i64: 1>, scalar_prefetch = 0 : i64, scratch_operands = 0 : i64, tpu.core_type = #tpu.core_type<tc>, window_params = [{transform_indices = @transform_0, window_bounds = array<i64: 8, 32>}, {pipeline_mode = #tpu.pipeline_mode<synchronous>, transform_indices = @transform_1, window_bounds = array<i64: 32, 128>}, {pipeline_mode = #tpu.pipeline_mode<synchronous>, transform_indices = @transform_2, window_bounds = array<i64: 1, 128>}, {pipeline_mode = #tpu.pipeline_mode<synchronous>, transform_indices = @transform_3, window_bounds = array<i64: 128, 128>}, {pipeline_mode = #tpu.pipeline_mode<synchronous>, transform_indices = @transform_4, window_bounds = array<i64: 1, 128>}, {pipeline_mode = #tpu.pipeline_mode<synchronous>, transform_indices = @transform_5, window_bounds = array<i64: 128, 128>}, {pipeline_mode = #tpu.pipeline_mode<synchronous>, transform_indices = @transform_6, window_bounds = array<i64: 1, 128>}, {transform_indices = @transform_7, window_bounds = array<i64: 8, 128>}]} {
    %c0 = arith.constant 0 : index
    %c0_0 = arith.constant 0 : index
    %0 = vector.load %arg1[%c0, %c0_0] : memref<8x32xf32, #tpu.memory_space<vmem>>, vector<8x32xf32>
    %c0_1 = arith.constant 0 : index
    %c0_2 = arith.constant 0 : index
    %1 = vector.load %arg2[%c0_1, %c0_2] : memref<32x128xbf16, #tpu.memory_space<vmem>>, vector<32x128xbf16>
    %c0_3 = arith.constant 0 : index
    %c0_4 = arith.constant 0 : index
    %2 = vector.load %arg3[%c0_3, %c0_4] : memref<1x128xf32, #tpu.memory_space<vmem>>, vector<1x128xf32>
    %3 = arith.truncf %0 : vector<8x32xf32> to vector<8x32xbf16>
    %cst = arith.constant dense<0.000000e+00> : vector<8x128xf32>
    %4 = tpu.matmul %3, %1, %cst {dimension_numbers = #tpu.dot_dimension_numbers<[1], [0], [0], [1], [0, 0, 1, 1], [], []>} : vector<8x32xbf16>, vector<32x128xbf16>, vector<8x128xf32> -> vector<8x128xf32>
    %5 = vector.broadcast %2 : vector<1x128xf32> to vector<8x128xf32>
    %6 = arith.addf %4, %5 : vector<8x128xf32>
    %cst_5 = arith.constant 0.000000e+00 : f32
    %7 = vector.broadcast %cst_5 : f32 to vector<8x128xf32>
    %8 = arith.maximumf %6, %7 : vector<8x128xf32>
    %c0_6 = arith.constant 0 : index
    %c0_7 = arith.constant 0 : index
    %9 = vector.load %arg4[%c0_6, %c0_7] : memref<128x128xbf16, #tpu.memory_space<vmem>>, vector<128x128xbf16>
    %c0_8 = arith.constant 0 : index
    %c0_9 = arith.constant 0 : index
    %10 = vector.load %arg5[%c0_8, %c0_9] : memref<1x128xf32, #tpu.memory_space<vmem>>, vector<1x128xf32>
    %11 = arith.truncf %8 : vector<8x128xf32> to vector<8x128xbf16>
    %cst_10 = arith.constant dense<0.000000e+00> : vector<8x128xf32>
    %12 = tpu.matmul %11, %9, %cst_10 {dimension_numbers = #tpu.dot_dimension_numbers<[1], [0], [0], [1], [0, 0, 1, 1], [], []>} : vector<8x128xbf16>, vector<128x128xbf16>, vector<8x128xf32> -> vector<8x128xf32>
    %13 = vector.broadcast %10 : vector<1x128xf32> to vector<8x128xf32>
    %14 = arith.addf %12, %13 : vector<8x128xf32>
    %cst_11 = arith.constant 0.000000e+00 : f32
    %15 = vector.broadcast %cst_11 : f32 to vector<8x128xf32>
    %16 = arith.maximumf %14, %15 : vector<8x128xf32>
    %c0_12 = arith.constant 0 : index
    %c0_13 = arith.constant 0 : index
    %17 = vector.load %arg6[%c0_12, %c0_13] : memref<128x128xbf16, #tpu.memory_space<vmem>>, vector<128x128xbf16>
    %c0_14 = arith.constant 0 : index
    %c0_15 = arith.constant 0 : index
    %18 = vector.load %arg7[%c0_14, %c0_15] : memref<1x128xf32, #tpu.memory_space<vmem>>, vector<1x128xf32>
    %19 = arith.truncf %16 : vector<8x128xf32> to vector<8x128xbf16>
    %cst_16 = arith.constant dense<0.000000e+00> : vector<8x128xf32>
    %20 = tpu.matmul %19, %17, %cst_16 {dimension_numbers = #tpu.dot_dimension_numbers<[1], [0], [0], [1], [0, 0, 1, 1], [], []>} : vector<8x128xbf16>, vector<128x128xbf16>, vector<8x128xf32> -> vector<8x128xf32>
    %21 = vector.broadcast %18 : vector<1x128xf32> to vector<8x128xf32>
    %22 = arith.addf %20, %21 : vector<8x128xf32>
    %cst_17 = arith.constant dense<0xFF800000> : vector<8xf32>
    %23 = vector.multi_reduction <maximumf>, %22, %cst_17 [1] : vector<8x128xf32> to vector<8xf32>
    %24 = vector.shape_cast %23 : vector<8xf32> to vector<8x1xf32>
    %25 = vector.broadcast %24 : vector<8x1xf32> to vector<8x128xf32>
    %26 = arith.subf %22, %25 : vector<8x128xf32>
    %27 = math.exp %26 : vector<8x128xf32>
    %cst_18 = arith.constant dense<0.000000e+00> : vector<8xf32>
    %28 = vector.multi_reduction <add>, %27, %cst_18 [1] : vector<8x128xf32> to vector<8xf32>
    %29 = vector.shape_cast %28 : vector<8xf32> to vector<8x1xf32>
    %30 = tpu.reciprocal %29 {approx = true} : vector<8x1xf32> -> vector<8x1xf32>
    %31 = vector.broadcast %30 : vector<8x1xf32> to vector<8x128xf32>
    %32 = arith.mulf %27, %31 : vector<8x128xf32>
    %c0_19 = arith.constant 0 : index
    %c0_20 = arith.constant 0 : index
    %33 = vector.load %arg8[%c0_19, %c0_20] : memref<8x128xf32, #tpu.memory_space<vmem>>, vector<8x128xf32>
    tpu.vector_store %arg8[%c0_19, %c0_20], %32 {strides = array<i32>} : memref<8x128xf32, #tpu.memory_space<vmem>>, vector<8x128xf32>,
    return
  }
  func.func @transform_0(%arg0: i32) -> (i32, i32) {
    %c0_i32 = arith.constant 0 : i32
    %c0_i32_0 = arith.constant 0 : i32
    return %arg0, %c0_i32 : i32, i32
  }
  func.func @transform_1(%arg0: i32) -> (i32, i32) {
    %c0_i32 = arith.constant 0 : i32
    %c0_i32_0 = arith.constant 0 : i32
    %c0_i32_1 = arith.constant 0 : i32
    return %c0_i32, %c0_i32_0 : i32, i32
  }
  func.func @transform_2(%arg0: i32) -> (i32, i32) {
    %c0_i32 = arith.constant 0 : i32
    %c0_i32_0 = arith.constant 0 : i32
    %c0_i32_1 = arith.constant 0 : i32
    return %c0_i32, %c0_i32_0 : i32, i32
  }
  func.func @transform_3(%arg0: i32) -> (i32, i32) {
    %c0_i32 = arith.constant 0 : i32
    %c0_i32_0 = arith.constant 0 : i32
    %c0_i32_1 = arith.constant 0 : i32
    return %c0_i32, %c0_i32_0 : i32, i32
  }
  func.func @transform_4(%arg0: i32) -> (i32, i32) {
    %c0_i32 = arith.constant 0 : i32
    %c0_i32_0 = arith.constant 0 : i32
    %c0_i32_1 = arith.constant 0 : i32
    return %c0_i32, %c0_i32_0 : i32, i32
  }
  func.func @transform_5(%arg0: i32) -> (i32, i32) {
    %c0_i32 = arith.constant 0 : i32
    %c0_i32_0 = arith.constant 0 : i32
    %c0_i32_1 = arith.constant 0 : i32
    return %c0_i32, %c0_i32_0 : i32, i32
  }
  func.func @transform_6(%arg0: i32) -> (i32, i32) {
    %c0_i32 = arith.constant 0 : i32
    %c0_i32_0 = arith.constant 0 : i32
    %c0_i32_1 = arith.constant 0 : i32
    return %c0_i32, %c0_i32_0 : i32, i32
  }
  func.func @transform_7(%arg0: i32) -> (i32, i32) {
    %c0_i32 = arith.constant 0 : i32
    %c0_i32_0 = arith.constant 0 : i32
    return %arg0, %c0_i32 : i32, i32
  }
}

</mosaic_0001>

<llo_original>
// kernel: tpu_custom_call.1
$region0: #{tpu_custom_call.1}
  #allocation0 [shape = 'u32[]', space=smem, size = 0x4, offset = 0x4, fixed_abs, tag = 'smem constant byte address 0x4 - core index']
  #allocation1 [shape = 'u32[144,128]{1,0:T(1,128)}', space=vmem, size = 0x12000, scoped, tag = 'internal scratch']
  %s0 = inlined_call_operand.hbm [shape: f32[8,32], index: 0, kind: input, shape index: {}]
  %s1 = inlined_call_operand.hbm [shape: bf16[32,128], index: 1, kind: input, shape index: {}]
  %s2 = inlined_call_operand.hbm [shape: f32[1,128], index: 2, kind: input, shape index: {}]
  %s3 = inlined_call_operand.hbm [shape: bf16[128,128], index: 3, kind: input, shape index: {}]
  %s4 = inlined_call_operand.hbm [shape: f32[1,128], index: 4, kind: input, shape index: {}]
  %s5 = inlined_call_operand.hbm [shape: bf16[128,128], index: 5, kind: input, shape index: {}]
  %s6 = inlined_call_operand.hbm [shape: f32[1,128], index: 6, kind: input, shape index: {}]
  %s7 = inlined_call_operand.hbm [shape: f32[8,128], index: 7, kind: output, shape index: {}]
  %s8 = sld [smem:[#allocation0]]
  $region66: #{tpu_custom_call.1} parent=0
    _
  %s10 = ssub.s32 1, %s8
  %s11 = scalar_select 0, %s10, %s8
  $region1: #{tpu_custom_call.1} parent=0
    #allocation2 [shape = 'u8[4096]{0}', space=vmem, size = 0x1000, scoped, tag = 'input window, operand 0, single buffered']
    #allocation3 [shape = 's32[1]{0}', space=sflag, size = 0x4, scoped, tag = 'scoped memory for tpu_custom_call.1']
    #allocation4 [shape = 's32[1]{0}', space=sflag, size = 0x4, scoped, tag = 'scoped memory for tpu_custom_call.1']
    #allocation5 [shape = 'u8[8192]{0}', space=vmem, size = 0x2000, scoped, tag = 'input window, operand 1, single buffered']
    #allocation6 [shape = 's32[1]{0}', space=sflag, size = 0x4, scoped, tag = 'scoped memory for tpu_custom_call.1']
    #allocation7 [shape = 'u8[512]{0}', space=vmem, size = 0x400, scoped, tag = 'input window, operand 2, single buffered']
    #allocation8 [shape = 'u8[32768]{0}', space=vmem, size = 0x8000, scoped, tag = 'input window, operand 3, single buffered']
    #allocation9 [shape = 's32[1]{0}', space=sflag, size = 0x4, scoped, tag = 'scoped memory for tpu_custom_call.1']
    #allocation10 [shape = 'u8[512]{0}', space=vmem, size = 0x400, scoped, tag = 'input window, operand 4, single buffered']
    #allocation11 [shape = 'u8[32768]{0}', space=vmem, size = 0x8000, scoped, tag = 'input window, operand 5, single buffered']
    #allocation12 [shape = 's32[1]{0}', space=sflag, size = 0x4, scoped, tag = 'scoped memory for tpu_custom_call.1']
    #allocation13 [shape = 'u8[512]{0}', space=vmem, size = 0x400, scoped, tag = 'input window, operand 6, single buffered']
    #allocation14 [shape = 'u8[4096]{0}', space=vmem, size = 0x1000, scoped, tag = 'output window, operand 0, single buffered']
    %12 = vsyncpa [#allocation3], 0
    %13 = vsyncpa [#allocation6], 0
    %14 = vsyncpa [#allocation9], 0
    %15 = vsyncpa [#allocation12], 0
    %16 = vsyncpa [#allocation4], 0
    // Predicated region
    $region2: #{tpu_custom_call.1} parent=1 // pred_check
      _
    $region3: #{tpu_custom_call.1} parent=1 // pred_check_branch
      %18 = sbr.rel (0) target = $region5
    $region4: #{tpu_custom_call.1} parent=1 // pred_region
      %s20 = ssub.s32 128, 128
      %21 = vsyncadd [#allocation3], %s20
      %s23 = sshll.u32 [#allocation2], 4
      %s24 = int_to_ptr.vmem [resolvable:$true] %s23
      %26 = dma.hbm_to_vmem [thread:$0]  %s0, 128, %s24, [#allocation3]
    $region5: #{tpu_custom_call.1} parent=1 // pred_fallthru
      _
    // Predicated region
    $region6: #{tpu_custom_call.1} parent=1 // pred_check
      _
    $region7: #{tpu_custom_call.1} parent=1 // pred_check_branch
      %28 = sbr.rel (0) target = $region9
    $region8: #{tpu_custom_call.1} parent=1 // pred_region
      %s30 = ssub.s32 256, 256
      %31 = vsyncadd [#allocation6], %s30
      %s32 = sshll.u32 [#allocation5], 4
      %s33 = int_to_ptr.vmem [resolvable:$true] %s32
      %38 = dma.hbm_to_vmem [thread:$0]  %s1, 256, %s33, [#allocation6], 64, 64, 4
    $region9: #{tpu_custom_call.1} parent=1 // pred_fallthru
      _
    // Predicated region
    $region10: #{tpu_custom_call.1} parent=1 // pred_check
      _
    $region11: #{tpu_custom_call.1} parent=1 // pred_check_branch
      %40 = sbr.rel (0) target = $region13
    $region12: #{tpu_custom_call.1} parent=1 // pred_region
      %s42 = ssub.s32 16, 16
      %43 = vsyncadd [#allocation6], %s42
      %s45 = sshll.u32 [#allocation7], 4
      %s46 = int_to_ptr.vmem [resolvable:$true] %s45
      %48 = dma.hbm_to_vmem [thread:$0]  %s2, 16, %s46, [#allocation6]
    $region13: #{tpu_custom_call.1} parent=1 // pred_fallthru
      _
    // Predicated region
    $region14: #{tpu_custom_call.1} parent=1 // pred_check
      _
    $region15: #{tpu_custom_call.1} parent=1 // pred_check_branch
      %50 = sbr.rel (0) target = $region17
    $region16: #{tpu_custom_call.1} parent=1 // pred_region
      %s52 = ssub.s32 1024, 1024
      %53 = vsyncadd [#allocation9], %s52
      %s54 = sshll.u32 [#allocation8], 4
      %s55 = int_to_ptr.vmem [resolvable:$true] %s54
      %60 = dma.hbm_to_vmem [thread:$0]  %s3, 1024, %s55, [#allocation9], 64, 64, 4
    $region17: #{tpu_custom_call.1} parent=1 // pred_fallthru
      _
    // Predicated region
    $region18: #{tpu_custom_call.1} parent=1 // pred_check
      _
    $region19: #{tpu_custom_call.1} parent=1 // pred_check_branch
      %62 = sbr.rel (0) target = $region21
    $region20: #{tpu_custom_call.1} parent=1 // pred_region
      %s64 = ssub.s32 16, 16
      %65 = vsyncadd [#allocation9], %s64
      %s67 = sshll.u32 [#allocation10], 4
      %s68 = int_to_ptr.vmem [resolvable:$true] %s67
      %70 = dma.hbm_to_vmem [thread:$0]  %s4, 16, %s68, [#allocation9]
    $region21: #{tpu_custom_call.1} parent=1 // pred_fallthru
      _
    // Predicated region
    $region22: #{tpu_custom_call.1} parent=1 // pred_check
      _
    $region23: #{tpu_custom_call.1} parent=1 // pred_check_branch
      %72 = sbr.rel (0) target = $region25
    $region24: #{tpu_custom_call.1} parent=1 // pred_region
      %s74 = ssub.s32 1024, 1024
      %75 = vsyncadd [#allocation12], %s74
      %s76 = sshll.u32 [#allocation11], 4
      %s77 = int_to_ptr.vmem [resolvable:$true] %s76
      %82 = dma.hbm_to_vmem [thread:$0]  %s5, 1024, %s77, [#allocation12], 64, 64, 4
    $region25: #{tpu_custom_call.1} parent=1 // pred_fallthru
      _
    // Predicated region
    $region26: #{tpu_custom_call.1} parent=1 // pred_check
      _
    $region27: #{tpu_custom_call.1} parent=1 // pred_check_branch
      %84 = sbr.rel (0) target = $region29
    $region28: #{tpu_custom_call.1} parent=1 // pred_region
      %s86 = ssub.s32 16, 16
      %87 = vsyncadd [#allocation12], %s86
      %s89 = sshll.u32 [#allocation13], 4
      %s90 = int_to_ptr.vmem [resolvable:$true] %s89
      %92 = dma.hbm_to_vmem [thread:$0]  %s6, 16, %s90, [#allocation12]
    $region29: #{tpu_custom_call.1} parent=1 // pred_fallthru
      _
    // Predicated region
    $region30: #{tpu_custom_call.1} parent=1 // pred_check
      _
    $region31: #{tpu_custom_call.1} parent=1 // pred_check_branch
      %94 = sbr.rel (0) target = $region33
    $region32: #{tpu_custom_call.1} parent=1 // pred_region
      %95 = dma.done [#allocation3], 128
    $region33: #{tpu_custom_call.1} parent=1 // pred_fallthru
      _
    // Predicated region
    $region34: #{tpu_custom_call.1} parent=1 // pred_check
      _
    $region35: #{tpu_custom_call.1} parent=1 // pred_check_branch
      %97 = sbr.rel (0) target = $region37
    $region36: #{tpu_custom_call.1} parent=1 // pred_region
      %98 = dma.done [#allocation6], 256
    $region37: #{tpu_custom_call.1} parent=1 // pred_fallthru
      _
    // Predicated region
    $region38: #{tpu_custom_call.1} parent=1 // pred_check
      _
    $region39: #{tpu_custom_call.1} parent=1 // pred_check_branch
      %100 = sbr.rel (0) target = $region41
    $region40: #{tpu_custom_call.1} parent=1 // pred_region
      %101 = dma.done [#allocation6], 16
    $region41: #{tpu_custom_call.1} parent=1 // pred_fallthru
      _
    // Predicated region
    $region42: #{tpu_custom_call.1} parent=1 // pred_check
      _
    $region43: #{tpu_custom_call.1} parent=1 // pred_check_branch
      %103 = sbr.rel (0) target = $region45
    $region44: #{tpu_custom_call.1} parent=1 // pred_region
      %104 = dma.done [#allocation9], 1024
    $region45: #{tpu_custom_call.1} parent=1 // pred_fallthru
      _
    // Predicated region
    $region46: #{tpu_custom_call.1} parent=1 // pred_check
      _
    $region47: #{tpu_custom_call.1} parent=1 // pred_check_branch
      %106 = sbr.rel (0) target = $region49
    $region48: #{tpu_custom_call.1} parent=1 // pred_region
      %107 = dma.done [#allocation9], 16
    $region49: #{tpu_custom_call.1} parent=1 // pred_fallthru
      _
    // Predicated region
    $region50: #{tpu_custom_call.1} parent=1 // pred_check
      _
    $region51: #{tpu_custom_call.1} parent=1 // pred_check_branch
      %109 = sbr.rel (0) target = $region53
    $region52: #{tpu_custom_call.1} parent=1 // pred_region
      %110 = dma.done [#allocation12], 1024
    $region53: #{tpu_custom_call.1} parent=1 // pred_fallthru
      _
    // Predicated region
    $region54: #{tpu_custom_call.1} parent=1 // pred_check
      _
    $region55: #{tpu_custom_call.1} parent=1 // pred_check_branch
      %112 = sbr.rel (0) target = $region57
    $region56: #{tpu_custom_call.1} parent=1 // pred_region
      %113 = dma.done [#allocation12], 16
    $region57: #{tpu_custom_call.1} parent=1 // pred_fallthru
      _
    %v115 = vld [vmem:[#allocation2] sm:$0xff]
    %v116 = vld [vmem:[#allocation5] sm:$0xf]
    %v117 = vld [vmem:[#allocation5 + $0x4] sm:$0xf]
    %v118 = vld [vmem:[#allocation5 + $0x8] sm:$0xf]
    %v119 = vld [vmem:[#allocation5 + $0xc] sm:$0xf]
    %v120 = vld [vmem:[#allocation7] sm:$0x1]
    %v121 = vpack.c.bf16 %v115, %v115
    %v123 = vlaneseq
    %v124 = vshrl.u32 %v123, 7
    %v125 = vsub.s32 0, %v124
    %v126 = vrot.slane %v120, %v125
    %v132 = vunpack.c.l.b16 %v116
    %v133 = vunpack.c.l.b16 %v117
    %v134 = vunpack.c.l.b16 %v118
    %v135 = vunpack.c.l.b16 %v119
    %v136 = vpack.c.b16 %v133, %v132
    %v137 = vpack.c.b16 %v135, %v134
    %vm140 = vcmask 261120
    %v142 = vsel %vm140, %v121, 0
    %144 = vmatprep.subr.bf16.mxu0 0
    %145 = vmatpush1.bf16.msra.mxu0 %v136
    %146 = vmatprep.subr.bf16.mxu0 0
    %147 = vmatpush1.bf16.msra.mxu0 %v137
    %148 = vmatprep.subr.bf16.mxu0 0
    %149 = vmatpush1.bf16.msra.mxu0 0
    %150 = vmatprep.subr.bf16.mxu0 0
    %151 = vmatpush1.bf16.msra.mxu0 0
    %152 = vmatprep.subr.bf16.mxu0 0
    %153 = vmatpush1.bf16.msra.mxu0 0
    %154 = vmatprep.subr.bf16.mxu0 0
    %155 = vmatpush1.bf16.msra.mxu0 0
    %156 = vmatprep.subr.bf16.mxu0 0
    %157 = vmatpush1.bf16.msra.mxu0 0
    %158 = vmatprep.subr.bf16.mxu0 0
    %159 = vmatpush1.bf16.msra.mxu0 0
    %160 = vmatprep.subr.bf16.mxu0 0
    %161 = vmatpush1.bf16.msra.mxu0 0
    %162 = vmatprep.subr.bf16.mxu0 0
    %163 = vmatpush1.bf16.msra.mxu0 0
    %164 = vmatprep.subr.bf16.mxu0 0
    %165 = vmatpush1.bf16.msra.mxu0 0
    %166 = vmatprep.subr.bf16.mxu0 0
    %167 = vmatpush1.bf16.msra.mxu0 0
    %168 = vmatprep.subr.bf16.mxu0 0
    %169 = vmatpush1.bf16.msra.mxu0 0
    %170 = vmatprep.subr.bf16.mxu0 0
    %171 = vmatpush1.bf16.msra.mxu0 0
    %172 = vmatprep.subr.bf16.mxu0 0
    %173 = vmatpush1.bf16.msra.mxu0 0
    %174 = vmatprep.subr.bf16.mxu0 0
    %175 = vmatpush1.bf16.msra.mxu0 0
    %176 = vmatprep.mubr.bf16.mxu0 0
    %177 = vmatmul.mubr.bf16.gmra.mrb[0].mxu0 %v142
    %v178 = vpop.f32.mrb[0].mxu0
    %v179 = vadd.f32 %v126, %v178
    %v180 = vpop.f32.mrb[0].mxu0
    %v181 = vpop.f32.mrb[0].mxu0
    %v182 = vpop.f32.mrb[0].mxu0
    %183 = vdwg.mxu0
    %v184 = vmax.f32 %v179, 0.0
    %v185 = vld [vmem:[#allocation8] sm:$0xf]
    %v186 = vld [vmem:[#allocation8 + $0x4] sm:$0xf]
    %v187 = vld [vmem:[#allocation8 + $0x8] sm:$0xf]
    %v188 = vld [vmem:[#allocation8 + $0xc] sm:$0xf]
    %v189 = vld [vmem:[#allocation8 + $0x10] sm:$0xf]
    %v190 = vld [vmem:[#allocation8 + $0x14] sm:$0xf]
    %v191 = vld [vmem:[#allocation8 + $0x18] sm:$0xf]
    %v192 = vld [vmem:[#allocation8 + $0x1c] sm:$0xf]
    %v193 = vld [vmem:[#allocation8 + $0x20] sm:$0xf]
    %v194 = vld [vmem:[#allocation8 + $0x24] sm:$0xf]
    %v195 = vld [vmem:[#allocation8 + $0x28] sm:$0xf]
    %v196 = vld [vmem:[#allocation8 + $0x2c] sm:$0xf]
    %v197 = vld [vmem:[#allocation8 + $0x30] sm:$0xf]
    %v198 = vld [vmem:[#allocation8 + $0x34] sm:$0xf]
    %v199 = vld [vmem:[#allocation8 + $0x38] sm:$0xf]
    %v200 = vld [vmem:[#allocation8 + $0x3c] sm:$0xf]
    %v201 = vld [vmem:[#allocation10] sm:$0x1]
    %v202 = vpack.c.bf16 %v184, %v184
    %v204 = vlaneseq
    %v205 = vshrl.u32 %v204, 7
    %v206 = vsub.s32 0, %v205
    %v207 = vrot.slane %v201, %v206
    %v225 = vunpack.c.l.b16 %v185
    %v226 = vunpack.c.l.b16 %v186
    %v227 = vunpack.c.l.b16 %v187
    %v228 = vunpack.c.l.b16 %v188
    %v229 = vunpack.c.l.b16 %v189
    %v230 = vunpack.c.l.b16 %v190
    %v231 = vunpack.c.l.b16 %v191
    %v232 = vunpack.c.l.b16 %v192
    %v233 = vunpack.c.l.b16 %v193
    %v234 = vunpack.c.l.b16 %v194
    %v235 = vunpack.c.l.b16 %v195
    %v236 = vunpack.c.l.b16 %v196
    %v237 = vunpack.c.l.b16 %v197
    %v238 = vunpack.c.l.b16 %v198
    %v239 = vunpack.c.l.b16 %v199
    %v240 = vunpack.c.l.b16 %v200
    %v241 = vpack.c.b16 %v226, %v225
    %v242 = vpack.c.b16 %v228, %v227
    %v243 = vpack.c.b16 %v230, %v229
    %v244 = vpack.c.b16 %v232, %v231
    %v245 = vpack.c.b16 %v234, %v233
    %v246 = vpack.c.b16 %v236, %v235
    %v247 = vpack.c.b16 %v238, %v237
    %v248 = vpack.c.b16 %v240, %v239
    %257 = vmatprep.subr.bf16.mxu0 0
    %258 = vmatpush1.bf16.msra.mxu0 %v241
    %259 = vmatprep.subr.bf16.mxu0 0
    %260 = vmatpush1.bf16.msra.mxu0 %v242
    %261 = vmatprep.subr.bf16.mxu0 0
    %262 = vmatpush1.bf16.msra.mxu0 %v243
    %263 = vmatprep.subr.bf16.mxu0 0
    %264 = vmatpush1.bf16.msra.mxu0 %v244
    %265 = vmatprep.subr.bf16.mxu0 0
    %266 = vmatpush1.bf16.msra.mxu0 %v245
    %267 = vmatprep.subr.bf16.mxu0 0
    %268 = vmatpush1.bf16.msra.mxu0 %v246
    %269 = vmatprep.subr.bf16.mxu0 0
    %270 = vmatpush1.bf16.msra.mxu0 %v247
    %271 = vmatprep.subr.bf16.mxu0 0
    %272 = vmatpush1.bf16.msra.mxu0 %v248
    %273 = vmatprep.subr.bf16.mxu0 0
    %274 = vmatpush1.bf16.msra.mxu0 0
    %275 = vmatprep.subr.bf16.mxu0 0
    %276 = vmatpush1.bf16.msra.mxu0 0
    %277 = vmatprep.subr.bf16.mxu0 0
    %278 = vmatpush1.bf16.msra.mxu0 0
    %279 = vmatprep.subr.bf16.mxu0 0
    %280 = vmatpush1.bf16.msra.mxu0 0
    %281 = vmatprep.subr.bf16.mxu0 0
    %282 = vmatpush1.bf16.msra.mxu0 0
    %283 = vmatprep.subr.bf16.mxu0 0
    %284 = vmatpush1.bf16.msra.mxu0 0
    %285 = vmatprep.subr.bf16.mxu0 0
    %286 = vmatpush1.bf16.msra.mxu0 0
    %287 = vmatprep.subr.bf16.mxu0 0
    %288 = vmatpush1.bf16.msra.mxu0 0
    %289 = vmatprep.mubr.bf16.mxu0 0
    %290 = vmatmul.mubr.bf16.gmra.mrb[0].mxu0 %v202
    %v291 = vpop.f32.mrb[0].mxu0
    %v292 = vadd.f32 %v207, %v291
    %v293 = vpop.f32.mrb[0].mxu0
    %v294 = vpop.f32.mrb[0].mxu0
    %v295 = vpop.f32.mrb[0].mxu0
    %296 = vdwg.mxu0
    %v297 = vmax.f32 %v292, 0.0
    %v298 = vld [vmem:[#allocation11] sm:$0xf]
    %v299 = vld [vmem:[#allocation11 + $0x4] sm:$0xf]
    %v300 = vld [vmem:[#allocation11 + $0x8] sm:$0xf]
    %v301 = vld [vmem:[#allocation11 + $0xc] sm:$0xf]
    %v302 = vld [vmem:[#allocation11 + $0x10] sm:$0xf]
    %v303 = vld [vmem:[#allocation11 + $0x14] sm:$0xf]
    %v304 = vld [vmem:[#allocation11 + $0x18] sm:$0xf]
    %v305 = vld [vmem:[#allocation11 + $0x1c] sm:$0xf]
    %v306 = vld [vmem:[#allocation11 + $0x20] sm:$0xf]
    %v307 = vld [vmem:[#allocation11 + $0x24] sm:$0xf]
    %v308 = vld [vmem:[#allocation11 + $0x28] sm:$0xf]
    %v309 = vld [vmem:[#allocation11 + $0x2c] sm:$0xf]
    %v310 = vld [vmem:[#allocation11 + $0x30] sm:$0xf]
    %v311 = vld [vmem:[#allocation11 + $0x34] sm:$0xf]
    %v312 = vld [vmem:[#allocation11 + $0x38] sm:$0xf]
    %v313 = vld [vmem:[#allocation11 + $0x3c] sm:$0xf]
    %v314 = vld [vmem:[#allocation13] sm:$0x1]
    %v315 = vpack.c.bf16 %v297, %v297
    %v317 = vlaneseq
    %v318 = vshrl.u32 %v317, 7
    %v319 = vsub.s32 0, %v318
    %v320 = vrot.slane %v314, %v319
    %v338 = vunpack.c.l.b16 %v298
    %v339 = vunpack.c.l.b16 %v299
    %v340 = vunpack.c.l.b16 %v300
    %v341 = vunpack.c.l.b16 %v301
    %v342 = vunpack.c.l.b16 %v302
    %v343 = vunpack.c.l.b16 %v303
    %v344 = vunpack.c.l.b16 %v304
    %v345 = vunpack.c.l.b16 %v305
    %v346 = vunpack.c.l.b16 %v306
    %v347 = vunpack.c.l.b16 %v307
    %v348 = vunpack.c.l.b16 %v308
    %v349 = vunpack.c.l.b16 %v309
    %v350 = vunpack.c.l.b16 %v310
    %v351 = vunpack.c.l.b16 %v311
    %v352 = vunpack.c.l.b16 %v312
    %v353 = vunpack.c.l.b16 %v313
    %v354 = vpack.c.b16 %v339, %v338
    %v355 = vpack.c.b16 %v341, %v340
    %v356 = vpack.c.b16 %v343, %v342
    %v357 = vpack.c.b16 %v345, %v344
    %v358 = vpack.c.b16 %v347, %v346
    %v359 = vpack.c.b16 %v349, %v348
    %v360 = vpack.c.b16 %v351, %v350
    %v361 = vpack.c.b16 %v353, %v352
    %370 = vmatprep.subr.bf16.mxu0 0
    %371 = vmatpush1.bf16.msra.mxu0 %v354
    %372 = vmatprep.subr.bf16.mxu0 0
    %373 = vmatpush1.bf16.msra.mxu0 %v355
    %374 = vmatprep.subr.bf16.mxu0 0
    %375 = vmatpush1.bf16.msra.mxu0 %v356
    %376 = vmatprep.subr.bf16.mxu0 0
    %377 = vmatpush1.bf16.msra.mxu0 %v357
    %378 = vmatprep.subr.bf16.mxu0 0
    %379 = vmatpush1.bf16.msra.mxu0 %v358
    %380 = vmatprep.subr.bf16.mxu0 0
    %381 = vmatpush1.bf16.msra.mxu0 %v359
    %382 = vmatprep.subr.bf16.mxu0 0
    %383 = vmatpush1.bf16.msra.mxu0 %v360
    %384 = vmatprep.subr.bf16.mxu0 0
    %385 = vmatpush1.bf16.msra.mxu0 %v361
    %386 = vmatprep.subr.bf16.mxu0 0
    %387 = vmatpush1.bf16.msra.mxu0 0
    %388 = vmatprep.subr.bf16.mxu0 0
    %389 = vmatpush1.bf16.msra.mxu0 0
    %390 = vmatprep.subr.bf16.mxu0 0
    %391 = vmatpush1.bf16.msra.mxu0 0
    %392 = vmatprep.subr.bf16.mxu0 0
    %393 = vmatpush1.bf16.msra.mxu0 0
    %394 = vmatprep.subr.bf16.mxu0 0
    %395 = vmatpush1.bf16.msra.mxu0 0
    %396 = vmatprep.subr.bf16.mxu0 0
    %397 = vmatpush1.bf16.msra.mxu0 0
    %398 = vmatprep.subr.bf16.mxu0 0
    %399 = vmatpush1.bf16.msra.mxu0 0
    %400 = vmatprep.subr.bf16.mxu0 0
    %401 = vmatpush1.bf16.msra.mxu0 0
    %402 = vmatprep.mubr.bf16.mxu0 0
    %403 = vmatmul.mubr.bf16.gmra.mrb[0].mxu0 %v315
    %v404 = vpop.f32.mrb[0].mxu0
    %v405 = vadd.f32 %v320, %v404
    %v406 = vpop.f32.mrb[0].mxu0
    %v407 = vpop.f32.mrb[0].mxu0
    %v408 = vpop.f32.mrb[0].mxu0
    %409 = vdwg.mxu0
    %410 = vmax.xlane.f32.xlu0 %v405
    %v411 = vpop.xlane.xlu0 %410
    %v412 = vsub.f32 %v405, %v411
    %v413 = vmul.f32 %v412, 1.442695
    %v414 = vpow.pop %v413
    %415 = vadd.xlane.f32.xlu0 %v414
    %v416 = vpop.xlane.xlu0 %415
    %v417 = vrcp.pop %v416
    %v418 = vmul.f32 %v414, %v417
    %419 = vst [vmem:[#allocation14] sm:$0xff] %v418
    // Predicated region
    $region58: #{tpu_custom_call.1} parent=1 // pred_check
      _
    $region59: #{tpu_custom_call.1} parent=1 // pred_check_branch
      %421 = sbr.rel (0) target = $region61
    $region60: #{tpu_custom_call.1} parent=1 // pred_region
      %s423 = ssub.s32 128, 128
      %424 = vsyncadd [#allocation4], %s423
      %s426 = sshll.u32 [#allocation14], 4
      %s427 = int_to_ptr.vmem [resolvable:$true] %s426
      %429 = dma.vmem_to_hbm [thread:$0]  %s427, 128, %s7, [#allocation4]
    $region61: #{tpu_custom_call.1} parent=1 // pred_fallthru
      _
    // Predicated region
    $region62: #{tpu_custom_call.1} parent=1 // pred_check
      _
    $region63: #{tpu_custom_call.1} parent=1 // pred_check_branch
      %431 = sbr.rel (0) target = $region65
    $region64: #{tpu_custom_call.1} parent=1 // pred_region
      %432 = dma.done [#allocation4], 128
    $region65: #{tpu_custom_call.1} parent=1 // pred_fallthru
      _
    %433 = vsyncpa [#allocation3], 1
    %434 = vsyncpa [#allocation6], 1
    %435 = vsyncpa [#allocation9], 1
    %436 = vsyncpa [#allocation12], 1
    %437 = vsyncpa [#allocation4], 1

</llo_original>
